<compile_context>
chip_gen: v7x
topology: tpu7x:2x2x1
jax: 0.10.0
libtpu: 0.0.40
codegen_flags: <defaults>
</compile_context>

<pallas_src>
import functools

import jax
import jax.numpy as jnp
from jax.experimental import pallas as pl
from jax.experimental.pallas import tpu as pltpu


def _round_up(x, m):
    return (x + m - 1) // m * m


def _normalize_adjacency(adj):
    """DGL GraphConv(norm='both'): Â_r = D_in^{-1/2} A_r D_out^{-1/2}, degrees clamped >= 1."""
    deg_in = jnp.maximum(adj.sum(axis=2), 1.0)[:, :, None]   # in-degree of dst node
    deg_out = jnp.maximum(adj.sum(axis=1), 1.0)[:, None, :]  # out-degree of src node
    return adj * deg_in ** -0.5 * deg_out ** -0.5


def _rgcn_layer_kernel(a_ref, x_ref, w_ref, bsum_ref, o_ref, acc_ref, *, apply_relu):
    """One grid step: acc += (Â_r[row_tile] @ X) @ W_r ; finalize with bias (+ReLU) at last r.

    a_ref:    (tm, N_pad)        bf16   row tile of relation r's normalized adjacency
    x_ref:    (N_pad, F_in)      bf16   all node features (grid-constant)
    w_ref:    (F_in, F_out)      bf16   relation r's weight
    bsum_ref: (1, F_out)         f32    sum of per-relation biases
    o_ref:    (tm, F_out)               output row tile
    acc_ref:  (tm, F_out)        f32    VMEM accumulator (resident across the relation axis)
    """
    r = pl.program_id(1)

    @pl.when(r == 0)
    def _():
        acc_ref[...] = jnp.zeros_like(acc_ref)

    # Both matmuls on the bf16 MXU path, accumulating in f32.
    ax = jnp.dot(a_ref[...], x_ref[...], preferred_element_type=jnp.float32)   # (tm, F_in) f32
    acc_ref[...] += jnp.dot(ax.astype(jnp.bfloat16), w_ref[...],
                            preferred_element_type=jnp.float32)                # (tm, F_out) f32

    @pl.when(r == pl.num_programs(1) - 1)
    def _():
        y = acc_ref[...] + bsum_ref[...]          # bias add in f32
        if apply_relu:
            y = jnp.maximum(y, 0.0)               # ReLU in f32 (VPU)
        o_ref[...] = y.astype(o_ref.dtype)


def _rgcn_layer(adj, x, w, bsum, *, apply_relu, out_dtype, tm):
    """sum_r ( adj[r] @ x @ w[r] ) + bsum  (optionally ReLU'd), on padded/lane-dense arrays."""
    num_rel, n_pad, _ = adj.shape
    f_in = x.shape[1]
    f_out = w.shape[-1]
    assert n_pad % tm == 0

    grid = (n_pad // tm, num_rel)   # reduction (relation) axis last, by convention

    kernel = functools.partial(_rgcn_layer_kernel, apply_relu=apply_relu)

    out_itemsize = 2 if out_dtype == jnp.bfloat16 else 4
    cost = pl.CostEstimate(
        flops=2 * num_rel * n_pad * (n_pad * f_in + f_in * f_out),
        transcendentals=0,
        bytes_accessed=(2 * (adj.size + x.size + w.size)
                        + 4 * bsum.size + out_itemsize * n_pad * f_out),
    )

    return pl.pallas_call(
        kernel,
        out_shape=jax.ShapeDtypeStruct((n_pad, f_out), out_dtype),
        grid_spec=pltpu.PrefetchScalarGridSpec(
            num_scalar_prefetch=0,
            grid=grid,
            in_specs=[
                # Row tile of relation r's adjacency (relation dim squeezed out).
                pl.BlockSpec((None, tm, n_pad), lambda i, r: (r, i, 0)),
                # All node features, grid-constant (bf16, stays resident).
                pl.BlockSpec((n_pad, f_in), lambda i, r: (0, 0)),
                # Relation r's weight: varies along r -> pipelined prefetch of next relation.
                pl.BlockSpec((None, f_in, f_out), lambda i, r: (r, 0, 0)),
                # Summed bias (tiny, grid-constant).
                pl.BlockSpec((1, f_out), lambda i, r: (0, 0)),
            ],
            # Same output block across the relation axis -> resident accumulator pattern.
            out_specs=pl.BlockSpec((tm, f_out), lambda i, r: (i, 0)),
            scratch_shapes=[pltpu.VMEM((tm, f_out), jnp.float32)],
        ),
        compiler_params=pltpu.CompilerParams(
            dimension_semantics=("parallel", "arbitrary"),
            vmem_limit_bytes=64 * 1024 * 1024,
        ),
        cost_estimate=cost,
    )(adj, x, w, bsum)


def rgcn_full_forward(adj, x, w1, b1, w2, b2, *, tm=None):
    """RGCNFull forward.

    adj: (R, N, N) raw 0/1 adjacency per relation (adj[r, i, j] = edge j -> i).
    x:   (N, in_feats) node features.
    w1:  (R, in_feats, hid_feats), b1: (R, hid_feats)   -- per-relation GraphConv layer 1
    w2:  (R, hid_feats, out_feats), b2: (R, out_feats)  -- per-relation GraphConv layer 2
    Returns (N, out_feats) float32.
    """
    num_rel, n, _ = adj.shape
    in_feats = x.shape[1]
    hid_feats = w1.shape[-1]
    out_feats = w2.shape[-1]

    # Degree normalization (graph prep) in plain JAX — one-off O(R*N^2) elementwise.
    adj_norm = _normalize_adjacency(adj)

    # ---- lane-dense padding: features -> multiples of 128, rows -> multiple of tm (>=8) ----
    fi = _round_up(in_feats, 128)
    fh = _round_up(hid_feats, 128)
    fo = _round_up(out_feats, 128)

    n8 = _round_up(n, 8)
    if tm is None:
        # Large N: 256-row tiles (>=256 MXU face, good HBM pipelining).
        # Small N: still give the grid >=2 row steps so pipelining / both v7x TCs engage.
        tm = 256 if n8 >= 512 else max(8, (n8 // 2) // 8 * 8)
    n_pad = _round_up(n8, tm)

    adj_p = jnp.pad(adj_norm, ((0, 0), (0, n_pad - n), (0, n_pad - n))).astype(jnp.bfloat16)
    x_p = jnp.pad(x, ((0, n_pad - n), (0, fi - in_feats))).astype(jnp.bfloat16)
    w1_p = jnp.pad(w1, ((0, 0), (0, fi - in_feats), (0, fh - hid_feats))).astype(jnp.bfloat16)
    w2_p = jnp.pad(w2, ((0, 0), (0, fh - hid_feats), (0, fo - out_feats))).astype(jnp.bfloat16)
    # aggregate='sum' over relations => biases sum as well.
    b1s = jnp.pad(b1.sum(axis=0), (0, fh - hid_feats)).reshape(1, fh).astype(jnp.float32)
    b2s = jnp.pad(b2.sum(axis=0), (0, fo - out_feats)).reshape(1, fo).astype(jnp.float32)

    # Layer 1 (fused ReLU); intermediate stored in bf16 — it only feeds the next MXU dots
    # (bias/ReLU were already applied in f32 inside the kernel).
    h = _rgcn_layer(adj_p, x_p, w1_p, b1s, apply_relu=True, out_dtype=jnp.bfloat16, tm=tm)
    # Layer 2 (no ReLU), f32 output.  Kept as a second pallas_call because each output row
    # tile of layer 2 needs *all* rows of h (A @ h mixes rows).
    out = _rgcn_layer(adj_p, h, w2_p, b2s, apply_relu=False, out_dtype=jnp.float32, tm=tm)

    return out[:n, :out_feats]


if __name__ == "__main__":
    key = jax.random.PRNGKey(0)
    k_adj, k_x, k_w1, k_b1, k_w2, k_b2 = jax.random.split(key, 6)

    num_rel, n_nodes = 3, 16
    in_feats, hid_feats, out_feats = 64, 32, 16

    # Random "hetero" graph: single node type, num_rel relation types, dense adjacency.
    adj = jax.random.bernoulli(k_adj, 0.5, (num_rel, n_nodes, n_nodes)).astype(jnp.float32)
    x = jax.random.normal(k_x, (n_nodes, in_feats), jnp.float32)

    def glorot(k, shape):
        bound = (6.0 / (shape[-2] + shape[-1])) ** 0.5
        return jax.random.uniform(k, shape, jnp.float32, -bound, bound)

    w1 = glorot(k_w1, (num_rel, in_feats, hid_feats))
    w2 = glorot(k_w2, (num_rel, hid_feats, out_feats))
    b1 = 0.1 * jax.random.normal(k_b1, (num_rel, hid_feats), jnp.float32)
    b2 = 0.1 * jax.random.normal(k_b2, (num_rel, out_feats), jnp.float32)

    out = rgcn_full_forward(adj, x, w1, b1, w2, b2)
    jax.block_until_ready(out)

    # ---- reference (a): exact module math in f32 ----
    adj_norm = _normalize_adjacency(adj)
    h_f32 = jnp.maximum(
        sum(adj_norm[r] @ x @ w1[r] + b1[r] for r in range(num_rel)), 0.0)
    out_f32 = sum(adj_norm[r] @ h_f32 @ w2[r] + b2[r] for r in range(num_rel))

    # ---- reference (b): same math with the kernel's bf16-MXU / f32-accumulate arithmetic ----
    def bf16_layer(a, xx, w, bsum):
        acc = 0.0
        xb = xx.astype(jnp.bfloat16)
        for r in range(num_rel):
            ax = jnp.dot(a[r].astype(jnp.bfloat16), xb, preferred_element_type=jnp.float32)
            acc = acc + jnp.dot(ax.astype(jnp.bfloat16), w[r].astype(jnp.bfloat16),
                                preferred_element_type=jnp.float32)
        return acc + bsum

    h_bf = jnp.maximum(bf16_layer(adj_norm, x, w1, b1.sum(axis=0)), 0.0)
    out_bf = bf16_layer(adj_norm, h_bf.astype(jnp.bfloat16), w2, b2.sum(axis=0))

    assert jnp.allclose(out, out_bf, atol=1e-2, rtol=1e-2), "mismatch vs bf16-matched reference"
    assert jnp.allclose(out, out_f32, atol=1e-1, rtol=1e-1), "mismatch vs f32 module reference"

    print("KERNEL_OK")
</pallas_src>

<mosaic_0001>
module attributes {stable_mosaic.version = 11 : i64} {
  func.func @_rgcn_layer_kernel(%arg0: i32, %arg1: i32, %arg2: memref<1x8x16xbf16, #tpu.memory_space<vmem>>, %arg3: memref<16x128xbf16, #tpu.memory_space<vmem>>, %arg4: memref<1x128x128xbf16, #tpu.memory_space<vmem>>, %arg5: memref<1x128xf32, #tpu.memory_space<vmem>>, %arg6: memref<8x128xbf16, #tpu.memory_space<vmem>>, %arg7: memref<8x128xf32, #tpu.memory_space<vmem>>) attributes {dimension_semantics = [#tpu.dimension_semantics<parallel>, #tpu.dimension_semantics<arbitrary>], iteration_bounds = array<i64: 2, 3>, scalar_prefetch = 0 : i64, scratch_operands = 1 : i64, tpu.core_type = #tpu.core_type<tc>, window_params = [{transform_indices = @transform_0, window_bounds = array<i64: 1, 8, 16>}, {pipeline_mode = #tpu.pipeline_mode<synchronous>, transform_indices = @transform_1, window_bounds = array<i64: 16, 128>}, {transform_indices = @transform_2, window_bounds = array<i64: 1, 128, 128>}, {pipeline_mode = #tpu.pipeline_mode<synchronous>, transform_indices = @transform_3, window_bounds = array<i64: 1, 128>}, {transform_indices = @transform_4, window_bounds = array<i64: 8, 128>}]} {
    %c0_i32 = arith.constant 0 : i32
    %0 = arith.cmpi eq, %arg1, %c0_i32 : i32
    %1 = arith.extui %0 : i1 to i32
    %c0_i32_0 = arith.constant 0 : i32
    %2 = arith.cmpi ne, %1, %c0_i32_0 : i32
    scf.if %2 {
      %cst_14 = arith.constant 0.000000e+00 : f32
      %17 = vector.broadcast %cst_14 : f32 to vector<8x128xf32>
      %c0_15 = arith.constant 0 : index
      %c0_16 = arith.constant 0 : index
      %18 = vector.load %arg7[%c0_15, %c0_16] : memref<8x128xf32, #tpu.memory_space<vmem>>, vector<8x128xf32>
      tpu.vector_store %arg7[%c0_15, %c0_16], %17 {strides = array<i32>} : memref<8x128xf32, #tpu.memory_space<vmem>>, vector<8x128xf32>,
    } else {
    }
    %c0 = arith.constant 0 : index
    %c0_1 = arith.constant 0 : index
    %c0_2 = arith.constant 0 : index
    %3 = vector.load %arg2[%c0, %c0_1, %c0_2] : memref<1x8x16xbf16, #tpu.memory_space<vmem>>, vector<1x8x16xbf16>
    %4 = vector.shape_cast %3 : vector<1x8x16xbf16> to vector<8x16xbf16>
    %c0_3 = arith.constant 0 : index
    %c0_4 = arith.constant 0 : index
    %5 = vector.load %arg3[%c0_3, %c0_4] : memref<16x128xbf16, #tpu.memory_space<vmem>>, vector<16x128xbf16>
    %cst = arith.constant dense<0.000000e+00> : vector<8x128xf32>
    %6 = tpu.matmul %4, %5, %cst {dimension_numbers = #tpu.dot_dimension_numbers<[1], [0], [0], [1], [0, 0, 1, 1], [], []>} : vector<8x16xbf16>, vector<16x128xbf16>, vector<8x128xf32> -> vector<8x128xf32>
    %c0_5 = arith.constant 0 : index
    %c0_6 = arith.constant 0 : index
    %7 = vector.load %arg7[%c0_5, %c0_6] : memref<8x128xf32, #tpu.memory_space<vmem>>, vector<8x128xf32>
    %8 = arith.truncf %6 : vector<8x128xf32> to vector<8x128xbf16>
    %c0_7 = arith.constant 0 : index
    %c0_8 = arith.constant 0 : index
    %c0_9 = arith.constant 0 : index
    %9 = vector.load %arg4[%c0_7, %c0_8, %c0_9] : memref<1x128x128xbf16, #tpu.memory_space<vmem>>, vector<1x128x128xbf16>
    %10 = vector.shape_cast %9 : vector<1x128x128xbf16> to vector<128x128xbf16>
    %cst_10 = arith.constant dense<0.000000e+00> : vector<8x128xf32>
    %11 = tpu.matmul %8, %10, %cst_10 {dimension_numbers = #tpu.dot_dimension_numbers<[1], [0], [0], [1], [0, 0, 1, 1], [], []>} : vector<8x128xbf16>, vector<128x128xbf16>, vector<8x128xf32> -> vector<8x128xf32>
    %12 = arith.addf %7, %11 : vector<8x128xf32>
    %c0_11 = arith.constant 0 : index
    %c0_12 = arith.constant 0 : index
    %13 = vector.load %arg7[%c0_11, %c0_12] : memref<8x128xf32, #tpu.memory_space<vmem>>, vector<8x128xf32>
    tpu.vector_store %arg7[%c0_11, %c0_12], %12 {strides = array<i32>} : memref<8x128xf32, #tpu.memory_space<vmem>>, vector<8x128xf32>,
    %c2_i32 = arith.constant 2 : i32
    %14 = arith.cmpi eq, %arg1, %c2_i32 : i32
    %15 = arith.extui %14 : i1 to i32
    %c0_i32_13 = arith.constant 0 : i32
    %16 = arith.cmpi ne, %15, %c0_i32_13 : i32
    scf.if %16 {
      %c0_14 = arith.constant 0 : index
      %c0_15 = arith.constant 0 : index
      %17 = vector.load %arg7[%c0_14, %c0_15] : memref<8x128xf32, #tpu.memory_space<vmem>>, vector<8x128xf32>
      %c0_16 = arith.constant 0 : index
      %c0_17 = arith.constant 0 : index
      %18 = vector.load %arg5[%c0_16, %c0_17] : memref<1x128xf32, #tpu.memory_space<vmem>>, vector<1x128xf32>
      %19 = vector.broadcast %18 : vector<1x128xf32> to vector<8x128xf32>
      %20 = arith.addf %17, %19 : vector<8x128xf32>
      %cst_18 = arith.constant 0.000000e+00 : f32
      %21 = vector.broadcast %cst_18 : f32 to vector<8x128xf32>
      %22 = arith.maximumf %20, %21 : vector<8x128xf32>
      %23 = arith.truncf %22 : vector<8x128xf32> to vector<8x128xbf16>
      %c0_19 = arith.constant 0 : index
      %c0_20 = arith.constant 0 : index
      %24 = vector.load %arg6[%c0_19, %c0_20] : memref<8x128xbf16, #tpu.memory_space<vmem>>, vector<8x128xbf16>
      tpu.vector_store %arg6[%c0_19, %c0_20], %23 {strides = array<i32>} : memref<8x128xbf16, #tpu.memory_space<vmem>>, vector<8x128xbf16>,
    } else {
    }
    return
  }
  func.func @transform_0(%arg0: i32, %arg1: i32) -> (i32, i32, i32) {
    %c0_i32 = arith.constant 0 : i32
    %c0_i32_0 = arith.constant 0 : i32
    return %arg1, %arg0, %c0_i32 : i32, i32, i32
  }
  func.func @transform_1(%arg0: i32, %arg1: i32) -> (i32, i32) {
    %c0_i32 = arith.constant 0 : i32
    %c0_i32_0 = arith.constant 0 : i32
    %c0_i32_1 = arith.constant 0 : i32
    return %c0_i32, %c0_i32_0 : i32, i32
  }
  func.func @transform_2(%arg0: i32, %arg1: i32) -> (i32, i32, i32) {
    %c0_i32 = arith.constant 0 : i32
    %c0_i32_0 = arith.constant 0 : i32
    %c0_i32_1 = arith.constant 0 : i32
    return %arg1, %c0_i32, %c0_i32_0 : i32, i32, i32
  }
  func.func @transform_3(%arg0: i32, %arg1: i32) -> (i32, i32) {
    %c0_i32 = arith.constant 0 : i32
    %c0_i32_0 = arith.constant 0 : i32
    %c0_i32_1 = arith.constant 0 : i32
    return %c0_i32, %c0_i32_0 : i32, i32
  }
  func.func @transform_4(%arg0: i32, %arg1: i32) -> (i32, i32) {
    %c0_i32 = arith.constant 0 : i32
    %c0_i32_0 = arith.constant 0 : i32
    return %arg0, %c0_i32 : i32, i32
  }
}

</mosaic_0001>

<llo_original>
// kernel: tpu_custom_call.1
$region0: #{tpu_custom_call.1}
  #allocation0 [shape = 'u32[]', space=smem, size = 0x4, offset = 0x4, fixed_abs, tag = 'smem constant byte address 0x4 - core index']
  #allocation1 [shape = 'u32[144,128]{1,0:T(1,128)}', space=vmem, size = 0x12000, scoped, tag = 'internal scratch']
  #allocation2 [shape = 'f32[8,128]{1,0:T(8,128)}', space=vmem, size = 0x1000, scoped, tag = 'scratch operand']
  %s0 = inlined_call_operand.hbm [shape: bf16[3,16,16], index: 0, kind: input, shape index: {}]
  %s1 = inlined_call_operand.hbm [shape: bf16[16,128], index: 1, kind: input, shape index: {}]
  %s2 = inlined_call_operand.hbm [shape: bf16[3,128,128], index: 2, kind: input, shape index: {}]
  %s3 = inlined_call_operand.hbm [shape: f32[1,128], index: 3, kind: input, shape index: {}]
  %s4 = inlined_call_operand.hbm [shape: bf16[16,128], index: 4, kind: output, shape index: {}]
  %s5 = sld [smem:[#allocation0]]
  $region73: #{tpu_custom_call.1} parent=0
    _
  %s7 = ssub.s32 1, %s5
  %s8 = scalar_select 0, %s7, %s5
  $region1: #{tpu_custom_call.1} parent=0
    #allocation3 [shape = 'u8[4096]{0}', space=vmem, size = 0x1000, scoped, tag = 'input window, operand 0']
    #allocation4 [shape = 's32[2]{0}', space=sflag, size = 0x8, scoped, tag = 'scoped memory for tpu_custom_call.1']
    #allocation5 [shape = 's32[2]{0}', space=sflag, size = 0x8, scoped, tag = 'scoped memory for tpu_custom_call.1']
    #allocation6 [shape = 'u8[4096]{0}', space=vmem, size = 0x1000, scoped, tag = 'input window, operand 1, single buffered']
    #allocation7 [shape = 's32[1]{0}', space=sflag, size = 0x4, scoped, tag = 'scoped memory for tpu_custom_call.1']
    #allocation8 [shape = 'u8[65536]{0}', space=vmem, size = 0x10000, scoped, tag = 'input window, operand 2']
    #allocation9 [shape = 'u8[512]{0}', space=vmem, size = 0x400, scoped, tag = 'input window, operand 3, single buffered']
    #allocation10 [shape = 'u8[4096]{0}', space=vmem, size = 0x1000, scoped, tag = 'output window, operand 0']
    %9 = vsyncpa [#allocation4], 0
    %s10 = scalar_lea.sflag [#allocation4], 1
    %11 = vsyncpa %s10, 0
    %12 = vsyncpa [#allocation7], 0
    %13 = vsyncpa [#allocation5], 0
    %s14 = scalar_lea.sflag [#allocation5], 1
    %15 = vsyncpa %s14, 0
    loop: start=0, step=1, limit=8
    $region2: #{tpu_custom_call.1} parent=1 // loop_pre_header
      _
    $region3: #{tpu_custom_call.1} parent=1 // loop_header
      %s17 = sphi 0, %s21
      %p18 = scmp.ge.s32.totalorder %s17, 8
      %s24 = sphi 0, %s36
      %s25 = sphi 0, %s32
      %s26 = sphi 0, %s24
      %s27 = sphi 0, %s25
      %s28 = sphi 0, %s26
      %s29 = sphi 0, %s27
      %s41 = sphi 0, %s43
      %s44 = sphi 0, %s41
      %s45 = sphi 0, %s44
      %s61 = sphi 0, %s45
      %s65 = sphi 0, %s65
      %s67 = sphi 0, %s65
      %s68 = sphi 0, %s67
      %s82 = sphi 0, %s68
      %s88 = sphi 0, %s90
      %s91 = sphi 0, %s88
      %s92 = sphi 0, %s91
      %s108 = sphi 0, %s92
      %s112 = sphi 0, %s112
      %s114 = sphi 0, %s112
      %s115 = sphi 0, %s114
      %s129 = sphi 0, %s115
      %s135 = sphi 0, %s137
      %s138 = sphi 0, %s135
      %s139 = sphi 0, %s138
      %s155 = sphi 0, %s139
    $region4: #{tpu_custom_call.1} parent=1 // loop_header_branch
      %20 = sbr.rel (%p18) target = $region8
    $region5: #{tpu_custom_call.1} parent=1 // loop_body
      %s22 = ssub.s32 %s17, 1
      %s23 = ssub.s32 %s17, 2
      %s30 = sadd.s32 1, %s25
      %p31 = scmp.ge.s32.totalorder %s30, 3
      %s32 = scalar_select %p31, 0, %s30
      %s33 = sadd.s32 1, %s24
      %s34 = scalar_select %p31, %s33, %s24
      %p35 = scmp.ge.s32.totalorder %s34, 2
      %s36 = scalar_select %p35, 0, %s34
      %s37 = ssub.s32 %s25, %s32
      %s38 = ssub.s32 %s24, %s36
      %s39 = sor.u32 %s37, %s38
      %p40 = scmp.eq.s32.totalorder %s39, 0
      %s42 = sadd.s32 %s41, 1
      %s43 = scalar_select %p40, %s41, %s42
      %p46 = pneg %p40
      %p47 = scmp.eq.s32.totalorder %s17, 5
      %p48 = por %p46, %p47
      %p49 = scmp.ne.s32.totalorder %s41, %s44
      %p50 = scmp.eq.s32.totalorder %s17, 0
      %p51 = por %p49, %p50
      %p52 = scmp.ne.s32.totalorder %s41, %s44
      %p53 = scmp.eq.s32.totalorder %s22, 5
      %p54 = por %p52, %p53
      %p55 = scmp.ne.s32.totalorder %s44, %s45
      %p56 = scmp.eq.s32.totalorder %s22, 0
      %p57 = por %p55, %p56
      %p58 = scmp.ne.s32.totalorder %s44, %s45
      %p59 = scmp.eq.s32.totalorder %s23, 5
      %p60 = por %p58, %p59
      %p62 = scmp.ne.s32.totalorder %s45, %s61
      %p63 = scmp.eq.s32.totalorder %s23, 0
      %p64 = por %p62, %p63
      %s66 = sadd.s32 %s65, 1
      %p69 = scmp.eq.s32.totalorder %s17, 5
      %p70 = scmp.ne.s32.totalorder %s65, %s67
      %p71 = scmp.eq.s32.totalorder %s17, 0
      %p72 = por %p70, %p71
      %p73 = scmp.ne.s32.totalorder %s65, %s67
      %p74 = scmp.eq.s32.totalorder %s22, 5
      %p75 = por %p73, %p74
      %p76 = scmp.ne.s32.totalorder %s67, %s68
      %p77 = scmp.eq.s32.totalorder %s22, 0
      %p78 = por %p76, %p77
      %p79 = scmp.ne.s32.totalorder %s67, %s68
      %p80 = scmp.eq.s32.totalorder %s23, 5
      %p81 = por %p79, %p80
      %p83 = scmp.ne.s32.totalorder %s68, %s82
      %p84 = scmp.eq.s32.totalorder %s23, 0
      %p85 = por %p83, %p84
      %s86 = ssub.s32 %s25, %s32
      %p87 = scmp.eq.s32.totalorder %s86, 0
      %s89 = sadd.s32 %s88, 1
      %s90 = scalar_select %p87, %s88, %s89
      %p93 = pneg %p87
      %p94 = scmp.eq.s32.totalorder %s17, 5
      %p95 = por %p93, %p94
      %p96 = scmp.ne.s32.totalorder %s88, %s91
      %p97 = scmp.eq.s32.totalorder %s17, 0
      %p98 = por %p96, %p97
      %p99 = scmp.ne.s32.totalorder %s88, %s91
      %p100 = scmp.eq.s32.totalorder %s22, 5
      %p101 = por %p99, %p100
      %p102 = scmp.ne.s32.totalorder %s91, %s92
      %p103 = scmp.eq.s32.totalorder %s22, 0
      %p104 = por %p102, %p103
      %p105 = scmp.ne.s32.totalorder %s91, %s92
      %p106 = scmp.eq.s32.totalorder %s23, 5
      %p107 = por %p105, %p106
      %p109 = scmp.ne.s32.totalorder %s92, %s108
      %p110 = scmp.eq.s32.totalorder %s23, 0
      %p111 = por %p109, %p110
      %s113 = sadd.s32 %s112, 1
      %p116 = scmp.eq.s32.totalorder %s17, 5
      %p117 = scmp.ne.s32.totalorder %s112, %s114
      %p118 = scmp.eq.s32.totalorder %s17, 0
      %p119 = por %p117, %p118
      %p120 = scmp.ne.s32.totalorder %s112, %s114
      %p121 = scmp.eq.s32.totalorder %s22, 5
      %p122 = por %p120, %p121
      %p123 = scmp.ne.s32.totalorder %s114, %s115
      %p124 = scmp.eq.s32.totalorder %s22, 0
      %p125 = por %p123, %p124
      %p126 = scmp.ne.s32.totalorder %s114, %s115
      %p127 = scmp.eq.s32.totalorder %s23, 5
      %p128 = por %p126, %p127
      %p130 = scmp.ne.s32.totalorder %s115, %s129
      %p131 = scmp.eq.s32.totalorder %s23, 0
      %p132 = por %p130, %p131
      %s133 = ssub.s32 %s24, %s36
      %p134 = scmp.eq.s32.totalorder %s133, 0
      %s136 = sadd.s32 %s135, 1
      %s137 = scalar_select %p134, %s135, %s136
      %p140 = pneg %p134
      %p141 = scmp.eq.s32.totalorder %s17, 5
      %p142 = por %p140, %p141
      %p143 = scmp.ne.s32.totalorder %s135, %s138
      %p144 = scmp.eq.s32.totalorder %s17, 0
      %p145 = por %p143, %p144
      %p146 = scmp.ne.s32.totalorder %s135, %s138
      %p147 = scmp.eq.s32.totalorder %s22, 5
      %p148 = por %p146, %p147
      %p149 = scmp.ne.s32.totalorder %s138, %s139
      %p150 = scmp.eq.s32.totalorder %s22, 0
      %p151 = por %p149, %p150
      %p152 = scmp.ne.s32.totalorder %s138, %s139
      %p153 = scmp.eq.s32.totalorder %s23, 5
      %p154 = por %p152, %p153
      %p156 = scmp.ne.s32.totalorder %s139, %s155
      %p157 = scmp.eq.s32.totalorder %s23, 0
      %p158 = por %p156, %p157
      %p159 = scmp.le.s32.totalorder 1, %s17
      %p160 = scmp.lt.s32.totalorder %s17, 7
      %p161 = pnand %p159, %p160
      %p162 = pneg %p161
      // Predicated region
      $region9: #{tpu_custom_call.1} parent=5 // pred_check
        _
      $region10: #{tpu_custom_call.1} parent=5 // pred_check_branch
        %164 = sbr.rel (%p161) target = $region12
      $region11: #{tpu_custom_call.1} parent=5 // pred_region
        %s165 = ssub.s32 %s17, 1
        // Predicated region
        $region13: #{tpu_custom_call.1} parent=11 // pred_check
          %p166 = pneg %p78
        $region14: #{tpu_custom_call.1} parent=11 // pred_check_branch
          %168 = sbr.rel (%p166) target = $region16
        $region15: #{tpu_custom_call.1} parent=11 // pred_region
          %s170 = ssub.s32 128, 128
          %171 = vsyncadd [#allocation7], %s170
          %s172 = sshll.u32 [#allocation6], 4
          %s173 = int_to_ptr.vmem [resolvable:$true] %s172
          %178 = dma.hbm_to_vmem [thread:$0]  %s1, 128, %s173, [#allocation7], 64, 64, 4
        $region16: #{tpu_custom_call.1} parent=11 // pred_fallthru
          _
        // Predicated region
        $region17: #{tpu_custom_call.1} parent=11 // pred_check
          %p179 = pneg %p125
        $region18: #{tpu_custom_call.1} parent=11 // pred_check_branch
          %181 = sbr.rel (%p179) target = $region20
        $region19: #{tpu_custom_call.1} parent=11 // pred_region
          %s183 = ssub.s32 16, 16
          %184 = vsyncadd [#allocation7], %s183
          %s186 = sshll.u32 [#allocation9], 4
          %s187 = int_to_ptr.vmem [resolvable:$true] %s186
          %189 = dma.hbm_to_vmem [thread:$0]  %s3, 16, %s187, [#allocation7]
        $region20: #{tpu_custom_call.1} parent=11 // pred_fallthru
          _
      $region12: #{tpu_custom_call.1} parent=5 // pred_fallthru
        _
      %p190 = scmp.lt.s32.totalorder %s17, 6
      // Predicated region
      $region21: #{tpu_custom_call.1} parent=5 // pred_check
        %p191 = pneg %p190
      $region22: #{tpu_custom_call.1} parent=5 // pred_check_branch
        %193 = sbr.rel (%p191) target = $region24
      $region23: #{tpu_custom_call.1} parent=5 // pred_region
        // Predicated region
        $region25: #{tpu_custom_call.1} parent=23 // pred_check
          %p194 = pneg %p51
        $region26: #{tpu_custom_call.1} parent=23 // pred_check_branch
          %196 = sbr.rel (%p194) target = $region28
        $region27: #{tpu_custom_call.1} parent=23 // pred_region
          %s197 = sand.u32 %s17, 1
          %s198 = scalar_lea.sflag [#allocation4], %s197
          %s199 = sand.u32 %s41, 1
          %s200 = smul.addr %s199, 4
          %s201 = scalar_lea.vmem [#allocation3], %s200
          %s203 = ssub.s32 64, 64
          %204 = vsyncadd %s198, %s203
          %s205 = smul.addr %s25, 2
          %s206 = sadd.s32 %s24, %s205
          %s207 = smul.addr %s206, 64
          %s208 = scalar_lea.hbm %s0, %s207
          %s210 = sshll.u32 %s201, 4
          %s211 = int_to_ptr.vmem [resolvable:$true] %s210
          %213 = dma.hbm_to_vmem [thread:$0]  %s208, 64, %s211, %s198
        $region28: #{tpu_custom_call.1} parent=23 // pred_fallthru
          _
        // Predicated region
        $region29: #{tpu_custom_call.1} parent=23 // pred_check
          %p214 = pneg %p98
        $region30: #{tpu_custom_call.1} parent=23 // pred_check_branch
          %216 = sbr.rel (%p214) target = $region32
        $region31: #{tpu_custom_call.1} parent=23 // pred_region
          %s217 = sand.u32 %s17, 1
          %s218 = scalar_lea.sflag [#allocation4], %s217
          %s219 = sand.u32 %s88, 1
          %s220 = smul.addr %s219, 64
          %s221 = scalar_lea.vmem [#allocation8], %s220
          %s223 = ssub.s32 1024, 1024
          %224 = vsyncadd %s218, %s223
          %s225 = smul.addr %s25, 16
          %s226 = smul.addr %s225, 64
          %s227 = scalar_lea.hbm %s2, %s226
          %s228 = sshll.u32 %s221, 4
          %s229 = int_to_ptr.vmem [resolvable:$true] %s228
          %234 = dma.hbm_to_vmem [thread:$0]  %s227, 1024, %s229, %s218, 64, 64, 4
        $region32: #{tpu_custom_call.1} parent=23 // pred_fallthru
          _
      $region24: #{tpu_custom_call.1} parent=5 // pred_fallthru
        _
      %p235 = scmp.le.s32.totalorder 1, %s17
      %p236 = scmp.lt.s32.totalorder %s17, 7
      %p237 = pnand %p235, %p236
      %p238 = pneg %p237
      // Predicated region
      $region33: #{tpu_custom_call.1} parent=5 // pred_check
        _
      $region34: #{tpu_custom_call.1} parent=5 // pred_check_branch
        %240 = sbr.rel (%p237) target = $region36
      $region35: #{tpu_custom_call.1} parent=5 // pred_region
        %s241 = ssub.s32 %s17, 1
        %s242 = sand.u32 %s22, 1
        %s243 = scalar_lea.sflag [#allocation4], %s242
        %s244 = sand.u32 %s44, 1
        %s245 = smul.addr %s244, 4
        %s246 = scalar_lea.vmem [#allocation3], %s245
        // Predicated region
        $region37: #{tpu_custom_call.1} parent=35 // pred_check
          %p247 = pneg %p57
        $region38: #{tpu_custom_call.1} parent=35 // pred_check_branch
          %249 = sbr.rel (%p247) target = $region40
        $region39: #{tpu_custom_call.1} parent=35 // pred_region
          %250 = dma.done %s243, 64
        $region40: #{tpu_custom_call.1} parent=35 // pred_fallthru
          _
        // Predicated region
        $region41: #{tpu_custom_call.1} parent=35 // pred_check
          %p251 = pneg %p78
        $region42: #{tpu_custom_call.1} parent=35 // pred_check_branch
          %253 = sbr.rel (%p251) target = $region44
        $region43: #{tpu_custom_call.1} parent=35 // pred_region
          %254 = dma.done [#allocation7], 128
        $region44: #{tpu_custom_call.1} parent=35 // pred_fallthru
          _
        %s255 = sand.u32 %s22, 1
        %s256 = scalar_lea.sflag [#allocation4], %s255
        %s257 = sand.u32 %s91, 1
        %s258 = smul.addr %s257, 64
        %s259 = scalar_lea.vmem [#allocation8], %s258
        // Predicated region
        $region45: #{tpu_custom_call.1} parent=35 // pred_check
          %p260 = pneg %p104
        $region46: #{tpu_custom_call.1} parent=35 // pred_check_branch
          %262 = sbr.rel (%p260) target = $region48
        $region47: #{tpu_custom_call.1} parent=35 // pred_region
          %263 = dma.done %s256, 1024
        $region48: #{tpu_custom_call.1} parent=35 // pred_fallthru
          _
        // Predicated region
        $region49: #{tpu_custom_call.1} parent=35 // pred_check
          %p264 = pneg %p125
        $region50: #{tpu_custom_call.1} parent=35 // pred_check_branch
          %266 = sbr.rel (%p264) target = $region52
        $region51: #{tpu_custom_call.1} parent=35 // pred_region
          %267 = dma.done [#allocation7], 16
        $region52: #{tpu_custom_call.1} parent=35 // pred_fallthru
          _
        %s268 = sand.u32 %s22, 1
        %s269 = scalar_lea.sflag [#allocation4], %s268
        %s270 = sand.u32 %s44, 1
        %s271 = smul.addr %s270, 4
        %s272 = scalar_lea.vmem [#allocation3], %s271
        %p273 = pneg %p57
        %p274 = pneg %p54
        %p275 = pneg %p78
        %p276 = pneg %p75
        %s277 = sand.u32 %s22, 1
        %s278 = scalar_lea.sflag [#allocation4], %s277
        %s279 = sand.u32 %s91, 1
        %s280 = smul.addr %s279, 64
        %s281 = scalar_lea.vmem [#allocation8], %s280
        %p282 = pneg %p104
        %p283 = pneg %p101
        %p284 = pneg %p125
        %p285 = pneg %p122
        %p286 = pneg %p151
        %p287 = pneg %p148
        %s288 = sand.u32 %s138, 1
        %s289 = scalar_lea.sflag [#allocation5], %s288
        %s290 = sand.u32 %s138, 1
        %s291 = smul.addr %s290, 4
        %s292 = scalar_lea.vmem [#allocation10], %s291
        %p294 = scmp.eq.s32.totalorder %s27, 0
        // Predicated region
        $region53: #{tpu_custom_call.1} parent=35 // pred_check
          %p295 = pneg %p294
        $region54: #{tpu_custom_call.1} parent=35 // pred_check_branch
          %297 = sbr.rel (%p295) target = $region56
        $region55: #{tpu_custom_call.1} parent=35 // pred_region
          %298 = vst [vmem:[#allocation2] sm:$0xff] 0.0
        $region56: #{tpu_custom_call.1} parent=35 // pred_fallthru
          _
        %v299 = vld [vmem:[%s246] sm:$0xf]
        %v300 = vld [vmem:[#allocation6] sm:$0xf]
        %v301 = vld [vmem:[#allocation6 + $0x4] sm:$0xf]
        %v304 = vunpack.c.l.b16 %v300
        %v305 = vunpack.c.l.b16 %v301
        %v306 = vpack.c.b16 %v305, %v304
        %vm308 = vcmask 130048
        %v310 = vsel %vm308, %v299, 0
        %312 = vmatprep.subr.bf16.mxu0 0
        %313 = vmatpush1.bf16.msra.mxu0 %v306
        %314 = vmatprep.subr.bf16.mxu0 0
        %315 = vmatpush1.bf16.msra.mxu0 0
        %316 = vmatprep.subr.bf16.mxu0 0
        %317 = vmatpush1.bf16.msra.mxu0 0
        %318 = vmatprep.subr.bf16.mxu0 0
        %319 = vmatpush1.bf16.msra.mxu0 0
        %320 = vmatprep.subr.bf16.mxu0 0
        %321 = vmatpush1.bf16.msra.mxu0 0
        %322 = vmatprep.subr.bf16.mxu0 0
        %323 = vmatpush1.bf16.msra.mxu0 0
        %324 = vmatprep.subr.bf16.mxu0 0
        %325 = vmatpush1.bf16.msra.mxu0 0
        %326 = vmatprep.subr.bf16.mxu0 0
        %327 = vmatpush1.bf16.msra.mxu0 0
        %328 = vmatprep.subr.bf16.mxu0 0
        %329 = vmatpush1.bf16.msra.mxu0 0
        %330 = vmatprep.subr.bf16.mxu0 0
        %331 = vmatpush1.bf16.msra.mxu0 0
        %332 = vmatprep.subr.bf16.mxu0 0
        %333 = vmatpush1.bf16.msra.mxu0 0
        %334 = vmatprep.subr.bf16.mxu0 0
        %335 = vmatpush1.bf16.msra.mxu0 0
        %336 = vmatprep.subr.bf16.mxu0 0
        %337 = vmatpush1.bf16.msra.mxu0 0
        %338 = vmatprep.subr.bf16.mxu0 0
        %339 = vmatpush1.bf16.msra.mxu0 0
        %340 = vmatprep.subr.bf16.mxu0 0
        %341 = vmatpush1.bf16.msra.mxu0 0
        %342 = vmatprep.subr.bf16.mxu0 0
        %343 = vmatpush1.bf16.msra.mxu0 0
        %344 = vmatprep.mubr.bf16.mxu0 0
        %345 = vmatmul.mubr.bf16.gmra.mrb[0].mxu0 %v310
        %v346 = vpop.f32.mrb[0].mxu0
        %v347 = vadd.f32 0.0, %v346
        %v348 = vpop.f32.mrb[0].mxu0
        %v349 = vpop.f32.mrb[0].mxu0
        %v350 = vpop.f32.mrb[0].mxu0
        %351 = vdwg.mxu0
        %v352 = vld [vmem:[#allocation2] sm:$0xff]
        %v353 = vpack.c.bf16 %v347, %v347
        %v354 = vld [vmem:[%s259] sm:$0xf]
        %v355 = vld [vmem:[%s259 + $0x4] sm:$0xf]
        %v356 = vld [vmem:[%s259 + $0x8] sm:$0xf]
        %v357 = vld [vmem:[%s259 + $0xc] sm:$0xf]
        %v358 = vld [vmem:[%s259 + $0x10] sm:$0xf]
        %v359 = vld [vmem:[%s259 + $0x14] sm:$0xf]
        %v360 = vld [vmem:[%s259 + $0x18] sm:$0xf]
        %v361 = vld [vmem:[%s259 + $0x1c] sm:$0xf]
        %v362 = vld [vmem:[%s259 + $0x20] sm:$0xf]
        %v363 = vld [vmem:[%s259 + $0x24] sm:$0xf]
        %v364 = vld [vmem:[%s259 + $0x28] sm:$0xf]
        %v365 = vld [vmem:[%s259 + $0x2c] sm:$0xf]
        %v366 = vld [vmem:[%s259 + $0x30] sm:$0xf]
        %v367 = vld [vmem:[%s259 + $0x34] sm:$0xf]
        %v368 = vld [vmem:[%s259 + $0x38] sm:$0xf]
        %v369 = vld [vmem:[%s259 + $0x3c] sm:$0xf]
        %v386 = vunpack.c.l.b16 %v354
        %v387 = vunpack.c.l.b16 %v355
        %v388 = vunpack.c.l.b16 %v356
        %v389 = vunpack.c.l.b16 %v357
        %v390 = vunpack.c.l.b16 %v358
        %v391 = vunpack.c.l.b16 %v359
        %v392 = vunpack.c.l.b16 %v360
        %v393 = vunpack.c.l.b16 %v361
        %v394 = vunpack.c.l.b16 %v362
        %v395 = vunpack.c.l.b16 %v363
        %v396 = vunpack.c.l.b16 %v364
        %v397 = vunpack.c.l.b16 %v365
        %v398 = vunpack.c.l.b16 %v366
        %v399 = vunpack.c.l.b16 %v367
        %v400 = vunpack.c.l.b16 %v368
        %v401 = vunpack.c.l.b16 %v369
        %v402 = vpack.c.b16 %v387, %v386
        %v403 = vpack.c.b16 %v389, %v388
        %v404 = vpack.c.b16 %v391, %v390
        %v405 = vpack.c.b16 %v393, %v392
        %v406 = vpack.c.b16 %v395, %v394
        %v407 = vpack.c.b16 %v397, %v396
        %v408 = vpack.c.b16 %v399, %v398
        %v409 = vpack.c.b16 %v401, %v400
        %418 = vmatprep.subr.bf16.mxu0 0
        %419 = vmatpush1.bf16.msra.mxu0 %v402
        %420 = vmatprep.subr.bf16.mxu0 0
        %421 = vmatpush1.bf16.msra.mxu0 %v403
        %422 = vmatprep.subr.bf16.mxu0 0
        %423 = vmatpush1.bf16.msra.mxu0 %v404
        %424 = vmatprep.subr.bf16.mxu0 0
        %425 = vmatpush1.bf16.msra.mxu0 %v405
        %426 = vmatprep.subr.bf16.mxu0 0
        %427 = vmatpush1.bf16.msra.mxu0 %v406
        %428 = vmatprep.subr.bf16.mxu0 0
        %429 = vmatpush1.bf16.msra.mxu0 %v407
        %430 = vmatprep.subr.bf16.mxu0 0
        %431 = vmatpush1.bf16.msra.mxu0 %v408
        %432 = vmatprep.subr.bf16.mxu0 0
        %433 = vmatpush1.bf16.msra.mxu0 %v409
        %434 = vmatprep.subr.bf16.mxu0 0
        %435 = vmatpush1.bf16.msra.mxu0 0
        %436 = vmatprep.subr.bf16.mxu0 0
        %437 = vmatpush1.bf16.msra.mxu0 0
        %438 = vmatprep.subr.bf16.mxu0 0
        %439 = vmatpush1.bf16.msra.mxu0 0
        %440 = vmatprep.subr.bf16.mxu0 0
        %441 = vmatpush1.bf16.msra.mxu0 0
        %442 = vmatprep.subr.bf16.mxu0 0
        %443 = vmatpush1.bf16.msra.mxu0 0
        %444 = vmatprep.subr.bf16.mxu0 0
        %445 = vmatpush1.bf16.msra.mxu0 0
        %446 = vmatprep.subr.bf16.mxu0 0
        %447 = vmatpush1.bf16.msra.mxu0 0
        %448 = vmatprep.subr.bf16.mxu0 0
        %449 = vmatpush1.bf16.msra.mxu0 0
        %450 = vmatprep.mubr.bf16.mxu0 0
        %451 = vmatmul.mubr.bf16.gmra.mrb[0].mxu0 %v353
        %v452 = vpop.f32.mrb[0].mxu0
        %v453 = vadd.f32 0.0, %v452
        %v454 = vpop.f32.mrb[0].mxu0
        %v455 = vpop.f32.mrb[0].mxu0
        %v456 = vpop.f32.mrb[0].mxu0
        %457 = vdwg.mxu0
        %v458 = vadd.f32 %v352, %v453
        %459 = vst [vmem:[#allocation2] sm:$0xff] %v458
        %p460 = scmp.eq.s32.totalorder %s27, 2
        // Predicated region
        $region57: #{tpu_custom_call.1} parent=35 // pred_check
          %p461 = pneg %p460
        $region58: #{tpu_custom_call.1} parent=35 // pred_check_branch
          %463 = sbr.rel (%p461) target = $region60
        $region59: #{tpu_custom_call.1} parent=35 // pred_region
          %v464 = vld [vmem:[#allocation2] sm:$0xff]
          %v465 = vld [vmem:[#allocation9] sm:$0x1]
          %v467 = vlaneseq
          %v468 = vshrl.u32 %v467, 7
          %v469 = vsub.s32 0, %v468
          %v470 = vrot.slane %v465, %v469
          %v472 = vadd.f32 %v464, %v470
          %v473 = vmax.f32 %v472, 0.0
          %v474 = vpack.c.bf16 %v473, %v473
          %475 = vst [vmem:[%s292] sm:$0xf] %v474
        $region60: #{tpu_custom_call.1} parent=35 // pred_fallthru
          _
        %s476 = sand.u32 %s138, 1
        %s477 = scalar_lea.sflag [#allocation5], %s476
        %s478 = sand.u32 %s138, 1
        %s479 = smul.addr %s478, 4
        %s480 = scalar_lea.vmem [#allocation10], %s479
        // Predicated region
        $region61: #{tpu_custom_call.1} parent=35 // pred_check
          %p481 = pneg %p148
        $region62: #{tpu_custom_call.1} parent=35 // pred_check_branch
          %483 = sbr.rel (%p481) target = $region64
        $region63: #{tpu_custom_call.1} parent=35 // pred_region
          %s485 = ssub.s32 64, 64
          %486 = vsyncadd %s477, %s485
          %s487 = smul.addr %s26, 64
          %s488 = scalar_lea.hbm %s4, %s487
          %s490 = sshll.u32 %s480, 4
          %s491 = int_to_ptr.vmem [resolvable:$true] %s490
          %493 = dma.vmem_to_hbm [thread:$0]  %s491, 64, %s488, %s477
        $region64: #{tpu_custom_call.1} parent=35 // pred_fallthru
          _
      $region36: #{tpu_custom_call.1} parent=5 // pred_fallthru
        _
      %p494 = scmp.le.s32.totalorder 2, %s17
      // Predicated region
      $region65: #{tpu_custom_call.1} parent=5 // pred_check
        %p495 = pneg %p494
      $region66: #{tpu_custom_call.1} parent=5 // pred_check_branch
        %497 = sbr.rel (%p495) target = $region68
      $region67: #{tpu_custom_call.1} parent=5 // pred_region
        %s498 = ssub.s32 %s17, 2
        // Predicated region
        $region69: #{tpu_custom_call.1} parent=67 // pred_check
          %p499 = pneg %p154
        $region70: #{tpu_custom_call.1} parent=67 // pred_check_branch
          %501 = sbr.rel (%p499) target = $region72
        $region71: #{tpu_custom_call.1} parent=67 // pred_region
          %s502 = sand.u32 %s139, 1
          %s503 = scalar_lea.sflag [#allocation5], %s502
          %s504 = sand.u32 %s139, 1
          %s505 = smul.addr %s504, 4
          %s506 = scalar_lea.vmem [#allocation10], %s505
          %507 = dma.done %s503, 64
        $region72: #{tpu_custom_call.1} parent=67 // pred_fallthru
          _
      $region68: #{tpu_custom_call.1} parent=5 // pred_fallthru
        _
    $region6: #{tpu_custom_call.1} parent=1 // loop_footer
      %s21 = sadd.s32 1, %s17
    $region7: #{tpu_custom_call.1} parent=1 // loop_footer_branch
      %16 = sbr.rel target = $region3
    $region8: #{tpu_custom_call.1} parent=1 // loop_exit
      _
    %508 = vsyncpa [#allocation4], 1
    %s509 = scalar_lea.sflag [#allocation4], 1
    %510 = vsyncpa %s509, 1
    %511 = vsyncpa [#allocation7], 1
    %512 = vsyncpa [#allocation5], 1
    %s513 = scalar_lea.sflag [#allocation5], 1
    %514 = vsyncpa %s513, 1

</llo_original>
